<compile_context>
chip_gen: v6e
topology: v6e:2x2x1
jax: 0.10.0
libtpu: 0.0.40
codegen_flags: <defaults>
</compile_context>

<pallas_src>
import jax
import jax.numpy as jnp
from jax.experimental import pallas as pl
from jax.experimental.pallas import tpu as pltpu


def _round_up(x: int, m: int) -> int:
    return ((x + m - 1) // m) * m


def _physical_vmem_bytes() -> int:
    """Per-TensorCore VMEM capacity; conservative fallback if unknown."""
    try:
        info = pltpu.get_tpu_info()
        for attr in ("vmem_capacity_bytes", "vmem_size_bytes"):
            cap = getattr(info, attr, None)
            if cap:
                return int(cap)
    except Exception:
        pass
    return 64 << 20  # v7x per-TC size; v5e/v6e have 128 MiB


# ----------------------------------------------------------------------------
# Resident-table kernel: whole table lives in VMEM, loop over vocab chunks.
# ----------------------------------------------------------------------------
def _make_resident_kernel(token_tile: int, d_model: int, vocab_chunk: int, n_chunks: int):
    def kernel(lo_ref, hi_ref, ids_ref, table_ref, out_ref):
        ids = ids_ref[...]  # (T, 1) int32
        # Hoisted out of the chunk loop: JAX does not CSE broadcast_in_dim.
        col = jax.lax.broadcasted_iota(jnp.int32, (token_tile, vocab_chunk), 1)

        if n_chunks == 1:
            one_hot = (ids == col).astype(table_ref.dtype)
            acc = jnp.dot(one_hot, table_ref[...], preferred_element_type=jnp.float32)
        else:
            i = pl.program_id(0)
            lo = lo_ref[i]
            hi = hi_ref[i]

            def body(c, acc):
                base = c * vocab_chunk

                def do_chunk(a):
                    start = pl.multiple_of(base, vocab_chunk)
                    tbl = table_ref[pl.ds(start, vocab_chunk), :]
                    # Re-bias the tiny (T,1) ids instead of rebuilding the iota.
                    one_hot = ((ids - base) == col).astype(tbl.dtype)
                    return a + jnp.dot(one_hot, tbl, preferred_element_type=jnp.float32)

                # Skip chunks that cannot match any id in this tile.
                overlap = jnp.logical_and(hi >= base, lo < base + vocab_chunk)
                return jax.lax.cond(overlap, do_chunk, lambda a: a, acc)

            acc = jax.lax.fori_loop(
                0, n_chunks, body,
                jnp.zeros((token_tile, d_model), jnp.float32),
                unroll=min(n_chunks, 2))  # low unroll: (T,Vc) one-hot already ~64 vregs

        out_ref[...] = acc.astype(out_ref.dtype)

    return kernel


# ----------------------------------------------------------------------------
# Streamed-table kernel: 2-D grid (token tiles, vocab chunks), VMEM accumulator.
# ----------------------------------------------------------------------------
def _make_streamed_kernel(token_tile: int, chunk_rows: int):
    def kernel(lo_ref, hi_ref, ids_ref, table_ref, out_ref, acc_ref):
        i = pl.program_id(0)
        k = pl.program_id(1)

        @pl.when(k == 0)
        def _():
            acc_ref[...] = jnp.zeros_like(acc_ref)

        base = k * chunk_rows
        lo = lo_ref[i]
        hi = hi_ref[i]

        # Skip the MXU work for chunks outside [lo, hi] (the chunk DMA still
        # happens via the BlockSpec pipeline, but the matmul + one-hot build don't).
        @pl.when(jnp.logical_and(hi >= base, lo < base + chunk_rows))
        def _():
            ids = ids_ref[...]  # (T, 1) int32
            col = jax.lax.broadcasted_iota(jnp.int32, (token_tile, chunk_rows), 1)
            one_hot = ((ids - base) == col).astype(table_ref.dtype)
            acc_ref[...] += jnp.dot(one_hot, table_ref[...],
                                    preferred_element_type=jnp.float32)

        @pl.when(k == pl.num_programs(1) - 1)
        def _():
            out_ref[...] = acc_ref[...].astype(out_ref.dtype)

    return kernel


# ----------------------------------------------------------------------------
# Wrapper
# ----------------------------------------------------------------------------
def embedding_lookup(token_ids: jax.Array, table: jax.Array, *,
                     token_tile: int | None = None,
                     vocab_chunk: int = 256,
                     stream_chunk_rows: int = 512,
                     force_streamed: bool = False) -> jax.Array:
    """Equivalent of `table[token_ids]` (nn.Embedding forward)."""
    orig_shape = token_ids.shape
    ids_flat = token_ids.reshape(-1).astype(jnp.int32)
    n_tokens = int(ids_flat.shape[0])
    vocab, d_model = table.shape
    itemsize = jnp.dtype(table.dtype).itemsize

    # --- token tiling: one lane-dense (T, D) output tile per grid step -------
    if token_tile is None:
        token_tile = 128 if d_model >= 512 else 256
    t = min(token_tile, _round_up(n_tokens, 8))
    n_tiles = pl.cdiv(n_tokens, t)
    n_pad = n_tiles * t
    ids_padded = jnp.pad(ids_flat, (0, n_pad - n_tokens))  # pad with id 0 (valid row, sliced off)
    ids_col = ids_padded.reshape(n_pad, 1)                 # (N, 1): cheap lane-broadcast in kernel

    # Per-tile id range for chunk skipping (scalar-prefetched into SMEM).
    ids_tiles = ids_padded.reshape(n_tiles, t)
    tile_lo = jnp.min(ids_tiles, axis=1).astype(jnp.int32)
    tile_hi = jnp.max(ids_tiles, axis=1).astype(jnp.int32)

    # --- VMEM bookkeeping -----------------------------------------------------
    vmem_cap = _physical_vmem_bytes()
    ids_bytes = 2 * t * 128 * 4                 # ids tile is lane-padded to (t,128), x2 buffers
    out_bytes = 2 * t * d_model * itemsize      # double-buffered output tiles
    acc_bytes = t * d_model * 4                 # f32 accumulator (scratch or spilled carry)

    vc = _round_up(min(vocab_chunk, _round_up(vocab, 8)), 8)
    v_pad_res = _round_up(vocab, vc)
    n_chunks_res = v_pad_res // vc
    table_bytes = v_pad_res * d_model * itemsize           # single copy (memory_space=VMEM)
    onehot_bytes = t * vc * 4
    needed_resident = table_bytes + ids_bytes + out_bytes + acc_bytes + onehot_bytes + (2 << 20)

    use_resident = (not force_streamed) and (needed_resident + (6 << 20) <= vmem_cap)

    if use_resident:
        table_padded = (table if v_pad_res == vocab
                        else jnp.pad(table, ((0, v_pad_res - vocab), (0, 0))))
        kernel = _make_resident_kernel(t, d_model, vc, n_chunks_res)
        vmem_limit = int(min(max(needed_resident + (4 << 20), 32 << 20),
                             vmem_cap - (2 << 20)))
        out_padded = pl.pallas_call(
            kernel,
            out_shape=jax.ShapeDtypeStruct((n_pad, d_model), table.dtype),
            grid_spec=pltpu.PrefetchScalarGridSpec(
                num_scalar_prefetch=2,           # tile_lo, tile_hi -> SMEM
                grid=(n_tiles,),
                in_specs=[
                    pl.BlockSpec((t, 1), lambda i, lo, hi: (i, 0)),
                    # Whole table, unblocked in VMEM: copied from HBM once and
                    # single-buffered (not part of the double-buffered pipeline).
                    pl.BlockSpec(memory_space=pltpu.MemorySpace.VMEM),
                ],
                out_specs=pl.BlockSpec((t, d_model), lambda i, lo, hi: (i, 0)),
            ),
            compiler_params=pltpu.CompilerParams(
                # NOTE(v7x): with a parallel grid each TC holds its own table copy;
                # the residency check above is already against per-TC VMEM.
                dimension_semantics=("parallel",),
                vmem_limit_bytes=vmem_limit),
        )(tile_lo, tile_hi, ids_col, table_padded)
    else:
        # Streamed path: re-reads the table per token tile, but has no size cap.
        ck = _round_up(max(8, min(stream_chunk_rows, _round_up(vocab, 8))), 8)
        # Keep 2 chunk buffers under ~16 MiB.
        max_ck = max(8, ((16 << 20) // (2 * d_model * itemsize)) // 8 * 8)
        ck = max(8, min(ck, max_ck))
        v_pad_str = _round_up(vocab, ck)
        n_chunks_str = v_pad_str // ck
        table_padded = (table if v_pad_str == vocab
                        else jnp.pad(table, ((0, v_pad_str - vocab), (0, 0))))
        kernel = _make_streamed_kernel(t, ck)
        needed_streamed = (2 * ck * d_model * itemsize + ids_bytes + out_bytes
                           + acc_bytes + t * ck * 4 + (2 << 20))
        vmem_limit = int(min(max(needed_streamed + (4 << 20), 32 << 20),
                             vmem_cap - (2 << 20)))
        out_padded = pl.pallas_call(
            kernel,
            out_shape=jax.ShapeDtypeStruct((n_pad, d_model), table.dtype),
            grid_spec=pltpu.PrefetchScalarGridSpec(
                num_scalar_prefetch=2,           # tile_lo, tile_hi -> SMEM
                grid=(n_tiles, n_chunks_str),
                in_specs=[
                    pl.BlockSpec((t, 1), lambda i, k, lo, hi: (i, 0)),
                    pl.BlockSpec((ck, d_model), lambda i, k, lo, hi: (k, 0)),
                ],
                out_specs=pl.BlockSpec((t, d_model), lambda i, k, lo, hi: (i, 0)),
                scratch_shapes=[pltpu.VMEM((t, d_model), jnp.float32)],
            ),
            compiler_params=pltpu.CompilerParams(
                dimension_semantics=("parallel", "arbitrary"),
                vmem_limit_bytes=vmem_limit),
        )(tile_lo, tile_hi, ids_col, table_padded)

    return out_padded[:n_tokens].reshape(*orig_shape, d_model)


if __name__ == "__main__":
    # Module config (small, consistent with the nn.Module __init__).
    num_embeddings = 64
    embedding_dim = 128
    batch, seq = 2, 8

    key = jax.random.PRNGKey(0)
    k_table, k_ids = jax.random.split(key)

    # torch.nn.init.trunc_normal_(w, mean=0.0, std=1.0, a=-3, b=3)
    embedding_table = jax.random.truncated_normal(
        k_table, -3.0, 3.0, (num_embeddings, embedding_dim), dtype=jnp.float32)

    token_ids = jax.random.randint(
        k_ids, (batch, seq), minval=0, maxval=num_embeddings, dtype=jnp.int32)

    ref = embedding_table[token_ids]  # same semantics as torch fancy indexing

    # 1) resident path, single vocab chunk
    out = jax.block_until_ready(embedding_lookup(token_ids, embedding_table))
    assert out.shape == (batch, seq, embedding_dim), out.shape
    assert out.dtype == embedding_table.dtype
    assert jnp.allclose(out, ref), "Pallas embedding lookup mismatch (resident)"

    # 2) resident path, multi-chunk loop with chunk skipping
    out_c = jax.block_until_ready(
        embedding_lookup(token_ids, embedding_table, vocab_chunk=16))
    assert jnp.allclose(out_c, ref), "Pallas embedding lookup mismatch (resident, chunked)"

    # 3) streamed path (what large tables on v7x would take)
    out_s = jax.block_until_ready(
        embedding_lookup(token_ids, embedding_table,
                         force_streamed=True, stream_chunk_rows=32))
    assert jnp.allclose(out_s, ref), "Pallas embedding lookup mismatch (streamed)"

    print("KERNEL_OK")
</pallas_src>

<mosaic_0001>
module attributes {stable_mosaic.version = 11 : i64} {
  func.func @kernel(%arg0: i32, %arg1: memref<1xi32, #tpu.memory_space<smem>>, %arg2: memref<1xi32, #tpu.memory_space<smem>>, %arg3: memref<16x1xi32, #tpu.memory_space<vmem>>, %arg4: memref<64x128xf32, #tpu.memory_space<vmem>>, %arg5: memref<16x128xf32, #tpu.memory_space<vmem>>) attributes {dimension_semantics = [#tpu.dimension_semantics<parallel>], iteration_bounds = array<i64: 1>, scalar_prefetch = 2 : i64, scratch_operands = 0 : i64, tpu.core_type = #tpu.core_type<tc>, window_params = [{transform_indices = @transform_0, window_bounds = array<i64: 16, 1>}, {pipeline_mode = #tpu.pipeline_mode<synchronous>, transform_indices = @transform_1, window_bounds = array<i64: 64, 128>}, {transform_indices = @transform_2, window_bounds = array<i64: 16, 128>}]} {
    %c0 = arith.constant 0 : index
    %c0_0 = arith.constant 0 : index
    %0 = vector.load %arg3[%c0, %c0_0] : memref<16x1xi32, #tpu.memory_space<vmem>>, vector<16x1xi32>
    %1 = tpu.iota {dimensions = array<i32: 1>} : vector<16x64xi32>
    %2 = vector.broadcast %0 : vector<16x1xi32> to vector<16x64xi32>
    %3 = arith.cmpi eq, %2, %1 : vector<16x64xi32>
    %4 = arith.extui %3 : vector<16x64xi1> to vector<16x64xi32>
    %5 = arith.sitofp %4 : vector<16x64xi32> to vector<16x64xf32>
    %c0_1 = arith.constant 0 : index
    %c0_2 = arith.constant 0 : index
    %6 = vector.load %arg4[%c0_1, %c0_2] : memref<64x128xf32, #tpu.memory_space<vmem>>, vector<64x128xf32>
    %cst = arith.constant dense<0.000000e+00> : vector<16x128xf32>
    %7 = tpu.matmul %5, %6, %cst {dimension_numbers = #tpu.dot_dimension_numbers<[1], [0], [0], [1], [0, 0, 1, 1], [], []>} : vector<16x64xf32>, vector<64x128xf32>, vector<16x128xf32> -> vector<16x128xf32>
    %c0_3 = arith.constant 0 : index
    %c0_4 = arith.constant 0 : index
    %8 = vector.load %arg5[%c0_3, %c0_4] : memref<16x128xf32, #tpu.memory_space<vmem>>, vector<16x128xf32>
    tpu.vector_store %arg5[%c0_3, %c0_4], %7 {strides = array<i32>} : memref<16x128xf32, #tpu.memory_space<vmem>>, vector<16x128xf32>,
    return
  }
  func.func @transform_0(%arg0: i32, %arg1: memref<1xi32, #tpu.memory_space<smem>>, %arg2: memref<1xi32, #tpu.memory_space<smem>>) -> (i32, i32) {
    %c0_i32 = arith.constant 0 : i32
    %c0_i32_0 = arith.constant 0 : i32
    return %arg0, %c0_i32 : i32, i32
  }
  func.func @transform_1(%arg0: i32, %arg1: memref<1xi32, #tpu.memory_space<smem>>, %arg2: memref<1xi32, #tpu.memory_space<smem>>) -> (i32, i32) {
    %c0_i32 = arith.constant 0 : i32
    %c0_i32_0 = arith.constant 0 : i32
    %c0_i32_1 = arith.constant 0 : i32
    return %c0_i32, %c0_i32_0 : i32, i32
  }
  func.func @transform_2(%arg0: i32, %arg1: memref<1xi32, #tpu.memory_space<smem>>, %arg2: memref<1xi32, #tpu.memory_space<smem>>) -> (i32, i32) {
    %c0_i32 = arith.constant 0 : i32
    %c0_i32_0 = arith.constant 0 : i32
    return %arg0, %c0_i32 : i32, i32
  }
}

</mosaic_0001>

<llo_original>
// kernel: tpu_custom_call.1
$region0: #{tpu_custom_call.1}
  #allocation0 [shape = 'u32[]', space=smem, size = 0x4, offset = 0x4, fixed_abs, tag = 'smem constant byte address 0x4 - core index']
  #allocation1 [shape = 'u32[144,128]{1,0:T(1,128)}', space=vmem, size = 0x12000, scoped, tag = 'internal scratch']
  #allocation2 [shape = 's32[1]{0}', space=sflag, size = 0x4, scoped, tag = 'scoped memory for tpu_custom_call.1']
  #allocation3 [shape = 's32[1]{0:T(128)S(6)}', space=smem, size = 0x200, scoped, tag = 'prefetched SMEM operand 0']
  #allocation4 [shape = 's32[1]{0:T(128)S(6)}', space=smem, size = 0x200, scoped, tag = 'prefetched SMEM operand 1']
  %s0 = inlined_call_operand.<no memory space> [shape: s32[1], index: 0, kind: input, shape index: {}]
  %s1 = inlined_call_operand.<no memory space> [shape: s32[1], index: 1, kind: input, shape index: {}]
  %s2 = inlined_call_operand.vmem [shape: s32[16,1], index: 2, kind: input, shape index: {}]
  %s3 = inlined_call_operand.hbm [shape: f32[64,128], index: 3, kind: input, shape index: {}]
  %s4 = inlined_call_operand.hbm [shape: f32[16,128], index: 4, kind: output, shape index: {}]
  %s5 = sld [smem:[#allocation0]]
  $region22: #{tpu_custom_call.1} parent=0
    _
  %s7 = ssub.s32 1, %s5
  %s8 = scalar_select 0, %s7, %s5
  %9 = sst [smem:[#allocation3]] %s0
  %10 = sst [smem:[#allocation4]] %s1
  $region1: #{tpu_custom_call.1} parent=0
    #allocation5 [shape = 'u8[32768]{0}', space=vmem, size = 0x8000, scoped, tag = 'input window, operand 3, single buffered']
    #allocation6 [shape = 's32[1]{0}', space=sflag, size = 0x4, scoped, tag = 'scoped memory for tpu_custom_call.1']
    #allocation7 [shape = 's32[1]{0}', space=sflag, size = 0x4, scoped, tag = 'scoped memory for tpu_custom_call.1']
    #allocation8 [shape = 'u8[8192]{0}', space=vmem, size = 0x2000, scoped, tag = 'output window, operand 0, single buffered']
    %11 = vsyncpa [#allocation6], 0
    %12 = vsyncpa [#allocation7], 0
    // Predicated region
    $region2: #{tpu_custom_call.1} parent=1 // pred_check
      _
    $region3: #{tpu_custom_call.1} parent=1 // pred_check_branch
      %14 = sbr.rel (0) target = $region5
    $region4: #{tpu_custom_call.1} parent=1 // pred_region
      _
    $region5: #{tpu_custom_call.1} parent=1 // pred_fallthru
      _
    // Predicated region
    $region6: #{tpu_custom_call.1} parent=1 // pred_check
      _
    $region7: #{tpu_custom_call.1} parent=1 // pred_check_branch
      %16 = sbr.rel (0) target = $region9
    $region8: #{tpu_custom_call.1} parent=1 // pred_region
      %s18 = ssub.s32 1024, 1024
      %19 = vsyncadd [#allocation6], %s18
      %s20 = sshll.u32 [#allocation5], 4
      %s21 = int_to_ptr.vmem [resolvable:$true] %s20
      %26 = dma.hbm_to_vmem [thread:$0]  %s3, 1024, %s21, [#allocation6], 128, 128, 8
    $region9: #{tpu_custom_call.1} parent=1 // pred_fallthru
      _
    // Predicated region
    $region10: #{tpu_custom_call.1} parent=1 // pred_check
      _
    $region11: #{tpu_custom_call.1} parent=1 // pred_check_branch
      %28 = sbr.rel (0) target = $region13
    $region12: #{tpu_custom_call.1} parent=1 // pred_region
      %29 = dma.done [#allocation6], 1024
    $region13: #{tpu_custom_call.1} parent=1 // pred_fallthru
      _
    %v30 = vld [vmem:[%s2] sm:$0xff]
    %v31 = vld [vmem:[%s2 + $0x8] sm:$0xff]
    %v32 = vlaneseq
    %v33 = vand.u32 %v32, 127
    %34 = vset.pattern.permute.xlu0 0
    %35 = vperm.xlu0 %34, %v30
    %v36 = vpop.permute.xlu0 %35
    %37 = vset.pattern.permute.xlu0 0
    %38 = vperm.xlu0 %37, %v31
    %v39 = vpop.permute.xlu0 %38
    %vm40 = vcmp.eq.s32.totalorder %v36, %v33
    %vm41 = vcmp.eq.s32.totalorder %v39, %v33
    %v42 = vsel %vm40, 1, 0
    %v43 = vsel %vm41, 1, 0
    %v44 = vcvt.s32.f32 %v42
    %v45 = vcvt.s32.f32 %v43
    %v46 = vld [vmem:[#allocation5] sm:$0xff]
    %v47 = vld [vmem:[#allocation5 + $0x8] sm:$0xff]
    %v48 = vld [vmem:[#allocation5 + $0x10] sm:$0xff]
    %v49 = vld [vmem:[#allocation5 + $0x18] sm:$0xff]
    %v50 = vld [vmem:[#allocation5 + $0x20] sm:$0xff]
    %v51 = vld [vmem:[#allocation5 + $0x28] sm:$0xff]
    %v52 = vld [vmem:[#allocation5 + $0x30] sm:$0xff]
    %v53 = vld [vmem:[#allocation5 + $0x38] sm:$0xff]
    %vm54 = vcmask 523264
    %v56 = vsel %vm54, %v44, 0
    %v59 = vsel %vm54, %v45, 0
    %61 = vmatprep.subr.mxu0 0.0
    %62 = vmatpush1.msra.mxu0 0.0
    %63 = vmatprep.subr.mxu0 0.0
    %64 = vmatpush1.msra.mxu0 0.0
    %65 = vmatprep.subr.mxu0 0.0
    %66 = vmatpush1.msra.mxu0 0.0
    %67 = vmatprep.subr.mxu0 0.0
    %68 = vmatpush1.msra.mxu0 0.0
    %69 = vmatprep.subr.mxu0 0.0
    %70 = vmatpush1.msra.mxu0 0.0
    %71 = vmatprep.subr.mxu0 0.0
    %72 = vmatpush1.msra.mxu0 0.0
    %73 = vmatprep.subr.mxu0 0.0
    %74 = vmatpush1.msra.mxu0 0.0
    %75 = vmatprep.subr.mxu0 0.0
    %76 = vmatpush1.msra.mxu0 0.0
    %77 = vmatprep.subr.mxu0 0.0
    %78 = vmatpush1.msra.mxu0 %v53
    %79 = vmatprep.subr.mxu0 0.0
    %80 = vmatpush1.msra.mxu0 %v52
    %81 = vmatprep.subr.mxu0 0.0
    %82 = vmatpush1.msra.mxu0 %v51
    %83 = vmatprep.subr.mxu0 0.0
    %84 = vmatpush1.msra.mxu0 %v50
    %85 = vmatprep.subr.mxu0 0.0
    %86 = vmatpush1.msra.mxu0 %v49
    %87 = vmatprep.subr.mxu0 0.0
    %88 = vmatpush1.msra.mxu0 %v48
    %89 = vmatprep.subr.mxu0 0.0
    %90 = vmatpush1.msra.mxu0 %v47
    %91 = vmatprep.subr.mxu0 0.0
    %92 = vmatpush1.msra.mxu0 %v46
    %93 = vmatprep.subr.mxu0 0.0
    %94 = vmatpush2.msra.mxu0 0.0
    %95 = vmatprep.subr.mxu0 0.0
    %96 = vmatpush2.msra.mxu0 0.0
    %97 = vmatprep.subr.mxu0 0.0
    %98 = vmatpush2.msra.mxu0 0.0
    %99 = vmatprep.subr.mxu0 0.0
    %100 = vmatpush2.msra.mxu0 0.0
    %101 = vmatprep.subr.mxu0 0.0
    %102 = vmatpush2.msra.mxu0 0.0
    %103 = vmatprep.subr.mxu0 0.0
    %104 = vmatpush2.msra.mxu0 0.0
    %105 = vmatprep.subr.mxu0 0.0
    %106 = vmatpush2.msra.mxu0 0.0
    %107 = vmatprep.subr.mxu0 0.0
    %108 = vmatpush2.msra.mxu0 0.0
    %109 = vmatprep.subr.mxu0 0.0
    %110 = vmatpush2.msra.mxu0 0.0
    %111 = vmatprep.subr.mxu0 0.0
    %112 = vmatpush2.msra.mxu0 0.0
    %113 = vmatprep.subr.mxu0 0.0
    %114 = vmatpush2.msra.mxu0 0.0
    %115 = vmatprep.subr.mxu0 0.0
    %116 = vmatpush2.msra.mxu0 0.0
    %117 = vmatprep.subr.mxu0 0.0
    %118 = vmatpush2.msra.mxu0 0.0
    %119 = vmatprep.subr.mxu0 0.0
    %120 = vmatpush2.msra.mxu0 0.0
    %121 = vmatprep.subr.mxu0 0.0
    %122 = vmatpush2.msra.mxu0 0.0
    %123 = vmatprep.subr.mxu0 0.0
    %124 = vmatpush2.msra.mxu0 0.0
    %125 = vmatprep.mubr.f32.mxu0 0.0
    %126 = vmatmul.mubr.f32.gmra.mxu0 %v56
    %v127 = vpop.f32.mrf.mxu0
    %v128 = vadd.f32 0.0, %v127
    %v129 = vpop.f32.mrf.mxu0
    %130 = vmatprep.mubr.f32.mxu0 0.0
    %131 = vmatmul.mubr.f32.gmra.mxu0 %v59
    %v132 = vpop.f32.mrf.mxu0
    %v133 = vadd.f32 0.0, %v132
    %v134 = vpop.f32.mrf.mxu0
    %135 = vdwg.mxu0
    %136 = vst [vmem:[#allocation8] sm:$0xff] %v128
    %137 = vst [vmem:[#allocation8 + $0x8] sm:$0xff] %v133
    // Predicated region
    $region14: #{tpu_custom_call.1} parent=1 // pred_check
      _
    $region15: #{tpu_custom_call.1} parent=1 // pred_check_branch
      %139 = sbr.rel (0) target = $region17
    $region16: #{tpu_custom_call.1} parent=1 // pred_region
      %s141 = ssub.s32 256, 256
      %142 = vsyncadd [#allocation7], %s141
      %s143 = sshll.u32 [#allocation8], 4
      %s144 = int_to_ptr.vmem [resolvable:$true] %s143
      %149 = dma.vmem_to_hbm [thread:$0]  %s144, 256, %s4, [#allocation7], 128, 128, 8
    $region17: #{tpu_custom_call.1} parent=1 // pred_fallthru
      _
    // Predicated region
    $region18: #{tpu_custom_call.1} parent=1 // pred_check
      _
    $region19: #{tpu_custom_call.1} parent=1 // pred_check_branch
      %151 = sbr.rel (0) target = $region21
    $region20: #{tpu_custom_call.1} parent=1 // pred_region
      %152 = dma.done [#allocation7], 256
    $region21: #{tpu_custom_call.1} parent=1 // pred_fallthru
      _
    %153 = vsyncpa [#allocation6], 1
    %154 = vsyncpa [#allocation7], 1

</llo_original>
